<compile_context>
chip_gen: v5e
topology: v5e:2x2
jax: 0.10.0
libtpu: 0.0.40
codegen_flags: <defaults>
</compile_context>

<pallas_src>
import functools

import jax
import jax.numpy as jnp
from jax import lax
from jax.experimental import pallas as pl
from jax.experimental.pallas import tpu as pltpu

LANES = 128      # vreg lane width
SUBLANES = 8     # f32 sublane tiling


def _round_up(n, m):
    return (n + m - 1) // m * m


@functools.lru_cache(maxsize=1)
def _vmem_limit_bytes():
    # ~75% of per-core VMEM: 96 MiB on v5e/v6e (128 MiB parts), 48 MiB on v7x.
    try:
        return int(pltpu.get_tpu_info().vmem_capacity_bytes) * 3 // 4
    except Exception:
        return 48 * 1024 * 1024


def _hyp_pair_kernel(x_i_ref, y_i_ref, multi_i_ref, x_j_ref, y_adj_j_ref, p_ref,
                     out_ref, *, nb, threshold):
    """Grid point (i, t): row-tile i vs row-tile j = (i + t) % nb.

    Output block of row-tile i is (1, 8, 128); sublane 0:
      lane 0: sum(y * cos)                      (proxy pass, written at t == 0)
      lane 1: sum((1 - y) * relu(cos - thr))    (proxy pass, written at t == 0)
      lane 2: weighted reg-term partial sum     (accumulated every t)
      lane 3: weighted zero-pair count partial  (accumulated every t)
    """
    t = pl.program_id(1)

    lane = lax.broadcasted_iota(jnp.int32, (1, SUBLANES, LANES), 2)
    sub = lax.broadcasted_iota(jnp.int32, (1, SUBLANES, LANES), 1)
    row0 = sub == 0

    def put(k, v):  # scalar v -> (1,8,128) tile with v at (sublane 0, lane k)
        return jnp.where(row0 & (lane == k), v, 0.0)

    x_i = x_i_ref[...]                 # (tb, Dp)  L2-normalized, matmul dtype
    y_i = y_i_ref[...]                 # (tb, Cp)  0/1 labels,   matmul dtype
    multi_i = multi_i_ref[...]         # (tb, 1)   f32, 1.0 iff row has > 1 label

    # ---------------- O(B^2) regularization pass: tile i vs tile j -------------
    # y_adj_j rows that are NOT multi-label (incl. padded rows) have +1 on every
    # class column, so any pair with a multi-label row of tile i gets a strictly
    # positive similarity and is excluded by the == 0 test (small integers:
    # exact even with bf16 operands / f32 accumulation).
    y_sim = lax.dot_general(y_i, y_adj_j_ref[...], (((1,), (1,)), ((), ())),
                            preferred_element_type=jnp.float32)     # (tb, tb)
    x_sim = lax.dot_general(x_i, x_j_ref[...], (((1,), (1,)), ((), ())),
                            preferred_element_type=jnp.float32)     # (tb, tb)
    m = jnp.where(y_sim == 0.0, multi_i, 0.0)                       # one select
    reg_s = jnp.sum(m * jnp.maximum(x_sim - threshold, 0.0))
    zc_s = jnp.sum(m)

    # Off-diagonal tile pairs are visited once -> weight 2 (x_sim / zero-pair
    # mask are symmetric).  The diagonal (t == 0) and, for even nb, the
    # t == nb/2 pair (visited from both endpoints) get weight 1.
    if nb % 2 == 0 and nb > 1:
        w = jnp.where((t == 0) | (t == nb // 2), 1.0, 2.0)
    else:
        w = jnp.where(t == 0, 1.0, 2.0)

    reg_stats = put(2, w * reg_s) + put(3, w * zc_s)

    # ---------------- proxy (pos/neg) pass: once per row tile ------------------
    @pl.when(t == 0)
    def _():
        cos = lax.dot_general(x_i, p_ref[...], (((1,), (1,)), ((), ())),
                              preferred_element_type=jnp.float32)   # (tb, Cp)
        y_f = y_i.astype(jnp.float32)
        pos_dot = jnp.sum(y_f * cos)                                 # sum(y*cos)
        neg_s = jnp.sum((1.0 - y_f) * jnp.maximum(cos - threshold, 0.0))
        out_ref[...] = put(0, pos_dot) + put(1, neg_s) + reg_stats

    @pl.when(t > 0)
    def _():
        out_ref[...] += reg_stats


def _hyp_proxy_kernel(x_ref, y_ref, p_ref, out_ref, *, threshold):
    """beta == 0 path: only the proxy pos/neg pass, grid = (nb,)."""
    lane = lax.broadcasted_iota(jnp.int32, (1, SUBLANES, LANES), 2)
    sub = lax.broadcasted_iota(jnp.int32, (1, SUBLANES, LANES), 1)

    def put(k, v):
        return jnp.where((sub == 0) & (lane == k), v, 0.0)

    cos = lax.dot_general(x_ref[...], p_ref[...], (((1,), (1,)), ((), ())),
                          preferred_element_type=jnp.float32)       # (tb, Cp)
    y_f = y_ref[...].astype(jnp.float32)
    pos_dot = jnp.sum(y_f * cos)
    neg_s = jnp.sum((1.0 - y_f) * jnp.maximum(cos - threshold, 0.0))
    out_ref[...] = put(0, pos_dot) + put(1, neg_s)


@functools.partial(jax.jit,
                   static_argnames=("beta", "threshold", "matmul_dtype", "tile_b"))
def hyp_loss(x, batch_y, proxies, beta=0.5, threshold=0.5,
             matmul_dtype=jnp.bfloat16, tile_b=512):
    """HyP loss. Labels must be 0/1 multi-hot; NaN if there are no positives."""
    B, D = x.shape
    C = proxies.shape[0]
    f32 = jnp.float32

    # Lane-dense padding; tb a multiple of 16 (bf16 sublane tile).
    Dp = _round_up(D, LANES)
    Cp = _round_up(C, LANES)
    tb = _round_up(min(int(tile_b), B), 16)
    Bp = _round_up(B, tb)
    nb = Bp // tb

    eps2 = 1e-24  # (torch F.normalize eps)^2; rsqrt(max(ss, eps^2)) == 1/max(||v||, eps)

    def l2n(v):
        ss = jnp.sum(v * v, axis=1, keepdims=True)
        return v * lax.rsqrt(jnp.maximum(ss, eps2))

    x_f = x.astype(f32)
    y_f = batch_y.astype(f32)

    # Normalize once in the wrapper, store narrow operands in HBM.
    xn = l2n(x_f)
    pn = l2n(proxies.astype(f32))
    multi = (jnp.sum(y_f, axis=1, keepdims=True) > 1.0).astype(f32)   # (B, 1)
    y_adj = y_f + (1.0 - multi)          # non-multi rows: +1 on every class col

    md = matmul_dtype
    x_p = jnp.zeros((Bp, Dp), md).at[:B, :D].set(xn.astype(md))
    y_p = jnp.zeros((Bp, Cp), md).at[:B, :C].set(y_f.astype(md))
    p_p = jnp.zeros((Cp, Dp), md).at[:C, :D].set(pn.astype(md))

    p_num = jnp.sum(y_f)                  # exact positive count (0/1 labels)
    vmem_limit = _vmem_limit_bytes()

    if beta > 0:
        # Padded rows initialized to ones -> not-multi -> excluded automatically.
        # (Padded class columns of real rows are also 1, but the lhs y_i is 0
        #  there, so they never contribute to the dot product.)
        y_adj_p = jnp.ones((Bp, Cp), md).at[:B, :C].set(y_adj.astype(md))
        multi_p = jnp.zeros((Bp, 1), f32).at[:B, :].set(multi)

        kernel = functools.partial(_hyp_pair_kernel, nb=nb,
                                   threshold=float(threshold))
        stats = pl.pallas_call(
            kernel,
            out_shape=jax.ShapeDtypeStruct((nb, SUBLANES, LANES), f32),
            grid=(nb, nb // 2 + 1),
            in_specs=[
                pl.BlockSpec((tb, Dp), lambda i, t: (i, 0)),             # x, tile i (resident)
                pl.BlockSpec((tb, Cp), lambda i, t: (i, 0)),             # y, tile i (resident)
                pl.BlockSpec((tb, 1), lambda i, t: (i, 0)),              # multi flags, tile i
                pl.BlockSpec((tb, Dp), lambda i, t: ((i + t) % nb, 0)),  # x, tile j
                pl.BlockSpec((tb, Cp), lambda i, t: ((i + t) % nb, 0)),  # adjusted y, tile j
                pl.BlockSpec((Cp, Dp), lambda i, t: (0, 0)),             # proxies (resident)
            ],
            out_specs=pl.BlockSpec((1, SUBLANES, LANES), lambda i, t: (i, 0, 0)),
            compiler_params=pltpu.CompilerParams(
                dimension_semantics=("parallel", "arbitrary"),
                vmem_limit_bytes=vmem_limit),
        )(x_p, y_p, multi_p, x_p, y_adj_p, p_p)
    else:
        kernel = functools.partial(_hyp_proxy_kernel, threshold=float(threshold))
        stats = pl.pallas_call(
            kernel,
            out_shape=jax.ShapeDtypeStruct((nb, SUBLANES, LANES), f32),
            grid=(nb,),
            in_specs=[
                pl.BlockSpec((tb, Dp), lambda i: (i, 0)),
                pl.BlockSpec((tb, Cp), lambda i: (i, 0)),
                pl.BlockSpec((Cp, Dp), lambda i: (0, 0)),
            ],
            out_specs=pl.BlockSpec((1, SUBLANES, LANES), lambda i: (i, 0, 0)),
            compiler_params=pltpu.CompilerParams(
                dimension_semantics=("parallel",),
                vmem_limit_bytes=vmem_limit),
        )(x_p, y_p, p_p)

    s = jnp.sum(stats, axis=(0, 1))                   # (128,) partial-sum reduce
    pos_dot, neg_sum = s[0], s[1]

    # Remove padded (cos == 0, y == 0) cells' relu(-threshold) contribution
    # (zero whenever threshold >= 0).
    pad_cells = float(Bp * Cp - B * C)
    neg_sum = neg_sum - pad_cells * max(-float(threshold), 0.0)
    n_num = float(B * C) - p_num

    # sum(y * (1 - cos)) == p_num - sum(y * cos)
    loss = (p_num - pos_dot) / p_num + neg_sum / n_num   # NaN if no positives (matches torch)
    if beta > 0:
        reg_sum, z_cnt = s[2], s[3]
        loss = loss + jnp.where(z_cnt > 0.0,
                                (float(beta) * reg_sum) / jnp.maximum(z_cnt, 1.0),
                                0.0)
    return loss


def hyp_loss_ref(x, y, proxies, beta=0.5, threshold=0.5):
    """Pure-JAX reference mirroring the PyTorch forward (mask-equivalent)."""
    eps = 1e-12
    xn = x / jnp.maximum(jnp.linalg.norm(x, axis=1, keepdims=True), eps)
    pn = proxies / jnp.maximum(jnp.linalg.norm(proxies, axis=1, keepdims=True), eps)
    cos = xn @ pn.T
    pos = 1.0 - cos
    neg = jnp.maximum(cos - threshold, 0.0)
    p_num = jnp.sum(y != 0.0)
    n_num = jnp.sum(y == 0.0)
    pos_term = jnp.sum(jnp.where(y == 1.0, pos, 0.0)) / p_num
    neg_term = jnp.sum(jnp.where(y == 0.0, neg, 0.0)) / n_num
    reg_term = 0.0
    if beta > 0:
        multi = (y.sum(axis=1) > 1.0).astype(jnp.float32)
        pair_sel = jnp.outer(multi, multi) > 0.0
        y_sim = y @ y.T
        zero_pair = pair_sel & (y_sim == 0.0)
        z_cnt = jnp.sum(zero_pair)
        x_sim = xn @ xn.T
        reg_neg = beta * jnp.maximum(x_sim - threshold, 0.0)
        reg_term = jnp.where(
            z_cnt > 0,
            jnp.sum(jnp.where(zero_pair, reg_neg, 0.0)) / jnp.maximum(z_cnt, 1),
            0.0,
        )
    return pos_term + neg_term + reg_term


def _make_inputs(key, B, num_bits, num_classes):
    kx, kp, ky = jax.random.split(key, 3)
    x = jax.random.normal(kx, (B, num_bits), dtype=jnp.float32)
    # proxies ~ kaiming_normal_(mode='fan_out'): std = sqrt(2 / num_classes)
    proxies = jax.random.normal(kp, (num_classes, num_bits), dtype=jnp.float32) \
        * jnp.sqrt(2.0 / num_classes)
    # deterministic multi-hot labels; every row has >= 1 label, most multi-label
    batch_y = (jax.random.uniform(ky, (B, num_classes)) < 0.25).astype(jnp.float32)
    batch_y = batch_y.at[jnp.arange(B), jnp.arange(B) % num_classes].set(1.0)
    return x, batch_y, proxies


if __name__ == "__main__":
    beta, threshold = 0.5, 0.5
    key = jax.random.PRNGKey(0)
    k1, k2, k3 = jax.random.split(key, 3)

    # --- test 1: module-sized shapes, single tile (nb = 1) ---------------------
    B, num_bits, num_classes = 8, 32, 16
    x, batch_y, proxies = _make_inputs(k1, B, num_bits, num_classes)
    ref = hyp_loss_ref(x, batch_y, proxies, beta=beta, threshold=threshold)

    loss_f32 = jax.block_until_ready(
        hyp_loss(x, batch_y, proxies, beta=beta, threshold=threshold,
                 matmul_dtype=jnp.float32))
    assert jnp.allclose(loss_f32, ref, rtol=1e-5, atol=1e-5), (loss_f32, ref)

    loss_bf16 = jax.block_until_ready(
        hyp_loss(x, batch_y, proxies, beta=beta, threshold=threshold))
    assert jnp.allclose(loss_bf16, ref, rtol=2e-2, atol=2e-2), (loss_bf16, ref)

    # --- test 2: even number of row tiles (nb = 4, exercises t == nb/2 weight) -
    B2 = 56
    x2, y2, p2 = _make_inputs(k2, B2, num_bits, num_classes)
    ref2 = hyp_loss_ref(x2, y2, p2, beta=beta, threshold=threshold)
    loss2 = jax.block_until_ready(
        hyp_loss(x2, y2, p2, beta=beta, threshold=threshold,
                 matmul_dtype=jnp.float32, tile_b=16))
    assert jnp.allclose(loss2, ref2, rtol=1e-5, atol=1e-5), (loss2, ref2)

    # --- test 3: odd number of row tiles (nb = 3) -------------------------------
    B3 = 40
    x3, y3, p3 = _make_inputs(k3, B3, num_bits, num_classes)
    ref3 = hyp_loss_ref(x3, y3, p3, beta=beta, threshold=threshold)
    loss3 = jax.block_until_ready(
        hyp_loss(x3, y3, p3, beta=beta, threshold=threshold,
                 matmul_dtype=jnp.float32, tile_b=16))
    assert jnp.allclose(loss3, ref3, rtol=1e-5, atol=1e-5), (loss3, ref3)

    # --- test 4: beta == 0 path (proxy-only kernel) -----------------------------
    ref0 = hyp_loss_ref(x2, y2, p2, beta=0.0, threshold=threshold)
    loss0 = jax.block_until_ready(
        hyp_loss(x2, y2, p2, beta=0.0, threshold=threshold,
                 matmul_dtype=jnp.float32, tile_b=16))
    assert jnp.allclose(loss0, ref0, rtol=1e-5, atol=1e-5), (loss0, ref0)

    print("KERNEL_OK")
</pallas_src>

<mosaic_0001>
module attributes {stable_mosaic.version = 11 : i64} {
  func.func @_hyp_pair_kernel(%arg0: i32, %arg1: i32, %arg2: memref<16x128xf32, #tpu.memory_space<vmem>>, %arg3: memref<16x128xf32, #tpu.memory_space<vmem>>, %arg4: memref<16x1xf32, #tpu.memory_space<vmem>>, %arg5: memref<16x128xf32, #tpu.memory_space<vmem>>, %arg6: memref<16x128xf32, #tpu.memory_space<vmem>>, %arg7: memref<128x128xf32, #tpu.memory_space<vmem>>, %arg8: memref<1x8x128xf32, #tpu.memory_space<vmem>>) attributes {dimension_semantics = [#tpu.dimension_semantics<parallel>, #tpu.dimension_semantics<arbitrary>], iteration_bounds = array<i64: 1, 1>, scalar_prefetch = 0 : i64, scratch_operands = 0 : i64, tpu.core_type = #tpu.core_type<tc>, window_params = [{transform_indices = @transform_0, window_bounds = array<i64: 16, 128>}, {transform_indices = @transform_1, window_bounds = array<i64: 16, 128>}, {transform_indices = @transform_2, window_bounds = array<i64: 16, 1>}, {transform_indices = @transform_3, window_bounds = array<i64: 16, 128>}, {transform_indices = @transform_4, window_bounds = array<i64: 16, 128>}, {pipeline_mode = #tpu.pipeline_mode<synchronous>, transform_indices = @transform_5, window_bounds = array<i64: 128, 128>}, {transform_indices = @transform_6, window_bounds = array<i64: 1, 8, 128>}]} {
    %0 = tpu.iota {dimensions = array<i32: 2>} : vector<1x8x128xi32>
    %1 = tpu.iota {dimensions = array<i32: 1>} : vector<1x8x128xi32>
    %c0_i32 = arith.constant 0 : i32
    %2 = vector.broadcast %c0_i32 : i32 to vector<1x8x128xi32>
    %3 = arith.cmpi eq, %1, %2 : vector<1x8x128xi32>
    %c0 = arith.constant 0 : index
    %c0_0 = arith.constant 0 : index
    %4 = vector.load %arg2[%c0, %c0_0] : memref<16x128xf32, #tpu.memory_space<vmem>>, vector<16x128xf32>
    %c0_1 = arith.constant 0 : index
    %c0_2 = arith.constant 0 : index
    %5 = vector.load %arg3[%c0_1, %c0_2] : memref<16x128xf32, #tpu.memory_space<vmem>>, vector<16x128xf32>
    %c0_3 = arith.constant 0 : index
    %c0_4 = arith.constant 0 : index
    %6 = vector.load %arg4[%c0_3, %c0_4] : memref<16x1xf32, #tpu.memory_space<vmem>>, vector<16x1xf32>
    %c0_5 = arith.constant 0 : index
    %c0_6 = arith.constant 0 : index
    %7 = vector.load %arg6[%c0_5, %c0_6] : memref<16x128xf32, #tpu.memory_space<vmem>>, vector<16x128xf32>
    %cst = arith.constant dense<0.000000e+00> : vector<16x16xf32>
    %8 = tpu.matmul %5, %7, %cst {dimension_numbers = #tpu.dot_dimension_numbers<[1], [1], [0], [0], [0, 0, 1, 0], [], []>} : vector<16x128xf32>, vector<16x128xf32>, vector<16x16xf32> -> vector<16x16xf32>
    %c0_7 = arith.constant 0 : index
    %c0_8 = arith.constant 0 : index
    %9 = vector.load %arg5[%c0_7, %c0_8] : memref<16x128xf32, #tpu.memory_space<vmem>>, vector<16x128xf32>
    %cst_9 = arith.constant dense<0.000000e+00> : vector<16x16xf32>
    %10 = tpu.matmul %4, %9, %cst_9 {dimension_numbers = #tpu.dot_dimension_numbers<[1], [1], [0], [0], [0, 0, 1, 0], [], []>} : vector<16x128xf32>, vector<16x128xf32>, vector<16x16xf32> -> vector<16x16xf32>
    %cst_10 = arith.constant 0.000000e+00 : f32
    %11 = vector.broadcast %cst_10 : f32 to vector<16x16xf32>
    %12 = arith.cmpf oeq, %8, %11 : vector<16x16xf32>
    %cst_11 = arith.constant 0.000000e+00 : f32
    %13 = vector.shape_cast %6 : vector<16x1xf32> to vector<16x1xf32>
    %14 = vector.broadcast %13 : vector<16x1xf32> to vector<16x16xf32>
    %15 = vector.broadcast %cst_11 : f32 to vector<16x16xf32>
    %16 = arith.select %12, %14, %15 : vector<16x16xi1>, vector<16x16xf32>
    %cst_12 = arith.constant 5.000000e-01 : f32
    %17 = vector.broadcast %cst_12 : f32 to vector<16x16xf32>
    %18 = arith.subf %10, %17 : vector<16x16xf32>
    %cst_13 = arith.constant 0.000000e+00 : f32
    %19 = vector.broadcast %cst_13 : f32 to vector<16x16xf32>
    %20 = arith.maximumf %18, %19 : vector<16x16xf32>
    %21 = arith.mulf %16, %20 : vector<16x16xf32>
    %22 = vector.shape_cast %21 : vector<16x16xf32> to vector<1x16x16xf32>
    %cst_14 = arith.constant dense<0.000000e+00> : vector<1xf32>
    %23 = vector.multi_reduction <add>, %22, %cst_14 [1, 2] : vector<1x16x16xf32> to vector<1xf32>
    %24 = vector.shape_cast %23 : vector<1xf32> to vector<1x1x1xf32>
    %25 = vector.extract %24[0, 0, 0] : f32 from vector<1x1x1xf32>
    %26 = vector.shape_cast %16 : vector<16x16xf32> to vector<1x16x16xf32>
    %cst_15 = arith.constant dense<0.000000e+00> : vector<1xf32>
    %27 = vector.multi_reduction <add>, %26, %cst_15 [1, 2] : vector<1x16x16xf32> to vector<1xf32>
    %28 = vector.shape_cast %27 : vector<1xf32> to vector<1x1x1xf32>
    %29 = vector.extract %28[0, 0, 0] : f32 from vector<1x1x1xf32>
    %c0_i32_16 = arith.constant 0 : i32
    %30 = arith.cmpi eq, %arg1, %c0_i32_16 : i32
    %cst_17 = arith.constant 1.000000e+00 : f32
    %cst_18 = arith.constant 2.000000e+00 : f32
    %31 = arith.select %30, %cst_17, %cst_18 : f32
    %32 = arith.mulf %31, %25 : f32
    %c2_i32 = arith.constant 2 : i32
    %33 = vector.broadcast %c2_i32 : i32 to vector<1x8x128xi32>
    %34 = arith.cmpi eq, %0, %33 : vector<1x8x128xi32>
    %35 = arith.andi %3, %34 : vector<1x8x128xi1>
    %cst_19 = arith.constant 0.000000e+00 : f32
    %36 = vector.broadcast %32 : f32 to vector<1x8x128xf32>
    %37 = vector.broadcast %cst_19 : f32 to vector<1x8x128xf32>
    %38 = arith.select %35, %36, %37 : vector<1x8x128xi1>, vector<1x8x128xf32>
    %39 = arith.mulf %31, %29 : f32
    %c3_i32 = arith.constant 3 : i32
    %40 = vector.broadcast %c3_i32 : i32 to vector<1x8x128xi32>
    %41 = arith.cmpi eq, %0, %40 : vector<1x8x128xi32>
    %42 = arith.andi %3, %41 : vector<1x8x128xi1>
    %cst_20 = arith.constant 0.000000e+00 : f32
    %43 = vector.broadcast %39 : f32 to vector<1x8x128xf32>
    %44 = vector.broadcast %cst_20 : f32 to vector<1x8x128xf32>
    %45 = arith.select %42, %43, %44 : vector<1x8x128xi1>, vector<1x8x128xf32>
    %46 = arith.addf %38, %45 : vector<1x8x128xf32>
    %c0_i32_21 = arith.constant 0 : i32
    %47 = arith.cmpi eq, %arg1, %c0_i32_21 : i32
    %48 = arith.extui %47 : i1 to i32
    %c0_i32_22 = arith.constant 0 : i32
    %49 = arith.cmpi ne, %48, %c0_i32_22 : i32
    scf.if %49 {
      %c0_25 = arith.constant 0 : index
      %c0_26 = arith.constant 0 : index
      %53 = vector.load %arg7[%c0_25, %c0_26] : memref<128x128xf32, #tpu.memory_space<vmem>>, vector<128x128xf32>
      %cst_27 = arith.constant dense<0.000000e+00> : vector<16x128xf32>
      %54 = tpu.matmul %4, %53, %cst_27 {dimension_numbers = #tpu.dot_dimension_numbers<[1], [1], [0], [0], [0, 0, 1, 0], [], []>} : vector<16x128xf32>, vector<128x128xf32>, vector<16x128xf32> -> vector<16x128xf32>
      %55 = arith.mulf %5, %54 : vector<16x128xf32>
      %56 = vector.shape_cast %55 : vector<16x128xf32> to vector<1x16x128xf32>
      %cst_28 = arith.constant dense<0.000000e+00> : vector<1xf32>
      %57 = vector.multi_reduction <add>, %56, %cst_28 [1, 2] : vector<1x16x128xf32> to vector<1xf32>
      %58 = vector.shape_cast %57 : vector<1xf32> to vector<1x1x1xf32>
      %59 = vector.extract %58[0, 0, 0] : f32 from vector<1x1x1xf32>
      %cst_29 = arith.constant 1.000000e+00 : f32
      %60 = vector.broadcast %cst_29 : f32 to vector<16x128xf32>
      %61 = arith.subf %60, %5 : vector<16x128xf32>
      %cst_30 = arith.constant 5.000000e-01 : f32
      %62 = vector.broadcast %cst_30 : f32 to vector<16x128xf32>
      %63 = arith.subf %54, %62 : vector<16x128xf32>
      %cst_31 = arith.constant 0.000000e+00 : f32
      %64 = vector.broadcast %cst_31 : f32 to vector<16x128xf32>
      %65 = arith.maximumf %63, %64 : vector<16x128xf32>
      %66 = arith.mulf %61, %65 : vector<16x128xf32>
      %67 = vector.shape_cast %66 : vector<16x128xf32> to vector<1x16x128xf32>
      %cst_32 = arith.constant dense<0.000000e+00> : vector<1xf32>
      %68 = vector.multi_reduction <add>, %67, %cst_32 [1, 2] : vector<1x16x128xf32> to vector<1xf32>
      %69 = vector.shape_cast %68 : vector<1xf32> to vector<1x1x1xf32>
      %70 = vector.extract %69[0, 0, 0] : f32 from vector<1x1x1xf32>
      %c0_i32_33 = arith.constant 0 : i32
      %71 = vector.broadcast %c0_i32_33 : i32 to vector<1x8x128xi32>
      %72 = arith.cmpi eq, %0, %71 : vector<1x8x128xi32>
      %73 = arith.andi %3, %72 : vector<1x8x128xi1>
      %cst_34 = arith.constant 0.000000e+00 : f32
      %74 = vector.broadcast %59 : f32 to vector<1x8x128xf32>
      %75 = vector.broadcast %cst_34 : f32 to vector<1x8x128xf32>
      %76 = arith.select %73, %74, %75 : vector<1x8x128xi1>, vector<1x8x128xf32>
      %c1_i32 = arith.constant 1 : i32
      %77 = vector.broadcast %c1_i32 : i32 to vector<1x8x128xi32>
      %78 = arith.cmpi eq, %0, %77 : vector<1x8x128xi32>
      %79 = arith.andi %3, %78 : vector<1x8x128xi1>
      %cst_35 = arith.constant 0.000000e+00 : f32
      %80 = vector.broadcast %70 : f32 to vector<1x8x128xf32>
      %81 = vector.broadcast %cst_35 : f32 to vector<1x8x128xf32>
      %82 = arith.select %79, %80, %81 : vector<1x8x128xi1>, vector<1x8x128xf32>
      %83 = arith.addf %76, %82 : vector<1x8x128xf32>
      %84 = arith.addf %83, %46 : vector<1x8x128xf32>
      %c0_36 = arith.constant 0 : index
      %c0_37 = arith.constant 0 : index
      %c0_38 = arith.constant 0 : index
      %85 = vector.load %arg8[%c0_36, %c0_37, %c0_38] : memref<1x8x128xf32, #tpu.memory_space<vmem>>, vector<1x8x128xf32>
      tpu.vector_store %arg8[%c0_36, %c0_37, %c0_38], %84 {strides = array<i32>} : memref<1x8x128xf32, #tpu.memory_space<vmem>>, vector<1x8x128xf32>,
    } else {
    }
    %c0_i32_23 = arith.constant 0 : i32
    %50 = arith.cmpi sgt, %arg1, %c0_i32_23 : i32
    %51 = arith.extui %50 : i1 to i32
    %c0_i32_24 = arith.constant 0 : i32
    %52 = arith.cmpi ne, %51, %c0_i32_24 : i32
    scf.if %52 {
      %c0_25 = arith.constant 0 : index
      %c0_26 = arith.constant 0 : index
      %c0_27 = arith.constant 0 : index
      %53 = vector.load %arg8[%c0_25, %c0_26, %c0_27] : memref<1x8x128xf32, #tpu.memory_space<vmem>>, vector<1x8x128xf32>
      %54 = arith.addf %53, %46 : vector<1x8x128xf32>
      %c0_28 = arith.constant 0 : index
      %c0_29 = arith.constant 0 : index
      %c0_30 = arith.constant 0 : index
      %55 = vector.load %arg8[%c0_28, %c0_29, %c0_30] : memref<1x8x128xf32, #tpu.memory_space<vmem>>, vector<1x8x128xf32>
      tpu.vector_store %arg8[%c0_28, %c0_29, %c0_30], %54 {strides = array<i32>} : memref<1x8x128xf32, #tpu.memory_space<vmem>>, vector<1x8x128xf32>,
    } else {
    }
    return
  }
  func.func @transform_0(%arg0: i32, %arg1: i32) -> (i32, i32) {
    %c0_i32 = arith.constant 0 : i32
    %c0_i32_0 = arith.constant 0 : i32
    return %arg0, %c0_i32 : i32, i32
  }
  func.func @transform_1(%arg0: i32, %arg1: i32) -> (i32, i32) {
    %c0_i32 = arith.constant 0 : i32
    %c0_i32_0 = arith.constant 0 : i32
    return %arg0, %c0_i32 : i32, i32
  }
  func.func @transform_2(%arg0: i32, %arg1: i32) -> (i32, i32) {
    %c0_i32 = arith.constant 0 : i32
    %c0_i32_0 = arith.constant 0 : i32
    return %arg0, %c0_i32 : i32, i32
  }
  func.func @transform_3(%arg0: i32, %arg1: i32) -> (i32, i32) {
    %0 = arith.addi %arg0, %arg1 : i32
    %c1_i32 = arith.constant 1 : i32
    %c0_i32 = arith.constant 0 : i32
    %1 = arith.cmpi eq, %c1_i32, %c0_i32 : i32
    %c1_i32_0 = arith.constant 1 : i32
    %2 = arith.select %1, %c1_i32_0, %c1_i32 : i32
    %3 = arith.remsi %0, %2 : i32
    %c0_i32_1 = arith.constant 0 : i32
    %4 = arith.cmpi ne, %3, %c0_i32_1 : i32
    %c0_i32_2 = arith.constant 0 : i32
    %5 = arith.cmpi slt, %3, %c0_i32_2 : i32
    %c0_i32_3 = arith.constant 0 : i32
    %6 = arith.cmpi slt, %2, %c0_i32_3 : i32
    %7 = arith.xori %5, %6 : i1
    %8 = arith.andi %7, %4 : i1
    %9 = arith.addi %3, %2 : i32
    %10 = arith.select %8, %9, %3 : i32
    %c0_i32_4 = arith.constant 0 : i32
    %c0_i32_5 = arith.constant 0 : i32
    return %10, %c0_i32_4 : i32, i32
  }
  func.func @transform_4(%arg0: i32, %arg1: i32) -> (i32, i32) {
    %0 = arith.addi %arg0, %arg1 : i32
    %c1_i32 = arith.constant 1 : i32
    %c0_i32 = arith.constant 0 : i32
    %1 = arith.cmpi eq, %c1_i32, %c0_i32 : i32
    %c1_i32_0 = arith.constant 1 : i32
    %2 = arith.select %1, %c1_i32_0, %c1_i32 : i32
    %3 = arith.remsi %0, %2 : i32
    %c0_i32_1 = arith.constant 0 : i32
    %4 = arith.cmpi ne, %3, %c0_i32_1 : i32
    %c0_i32_2 = arith.constant 0 : i32
    %5 = arith.cmpi slt, %3, %c0_i32_2 : i32
    %c0_i32_3 = arith.constant 0 : i32
    %6 = arith.cmpi slt, %2, %c0_i32_3 : i32
    %7 = arith.xori %5, %6 : i1
    %8 = arith.andi %7, %4 : i1
    %9 = arith.addi %3, %2 : i32
    %10 = arith.select %8, %9, %3 : i32
    %c0_i32_4 = arith.constant 0 : i32
    %c0_i32_5 = arith.constant 0 : i32
    return %10, %c0_i32_4 : i32, i32
  }
  func.func @transform_5(%arg0: i32, %arg1: i32) -> (i32, i32) {
    %c0_i32 = arith.constant 0 : i32
    %c0_i32_0 = arith.constant 0 : i32
    %c0_i32_1 = arith.constant 0 : i32
    return %c0_i32, %c0_i32_0 : i32, i32
  }
  func.func @transform_6(%arg0: i32, %arg1: i32) -> (i32, i32, i32) {
    %c0_i32 = arith.constant 0 : i32
    %c0_i32_0 = arith.constant 0 : i32
    %c0_i32_1 = arith.constant 0 : i32
    return %arg0, %c0_i32, %c0_i32_0 : i32, i32, i32
  }
}

</mosaic_0001>

<llo_original>
// kernel: hyp_loss.1
$region0: #{hyp_loss.1}
  #allocation0 [shape = 'u32[]', space=smem, size = 0x4, offset = 0x4, fixed_abs, tag = 'smem constant byte address 0x4 - core index']
  #allocation1 [shape = 'u32[72,128]{1,0:T(1,128)}', space=vmem, size = 0x9000, scoped, tag = 'internal scratch']
  %s0 = inlined_call_operand.vmem [shape: f32[16,128], index: 0, kind: input, shape index: {}, may-alias: {0,3}]
  %s1 = inlined_call_operand.vmem [shape: f32[16,128], index: 1, kind: input, shape index: {}]
  %s2 = inlined_call_operand.vmem [shape: f32[16,1], index: 2, kind: input, shape index: {}]
  %s3 = inlined_call_operand.vmem [shape: f32[16,128], index: 3, kind: input, shape index: {}, may-alias: {0,3}]
  %s4 = inlined_call_operand.vmem [shape: f32[16,128], index: 4, kind: input, shape index: {}]
  %s5 = inlined_call_operand.vmem [shape: f32[128,128], index: 5, kind: input, shape index: {}]
  %s6 = inlined_call_operand.vmem [shape: f32[1,8,128], index: 6, kind: output, shape index: {}]
  %s7 = sld [smem:[#allocation0]]
  $region42: #{hyp_loss.1} parent=0
    _
  %s9 = ssub.s32 1, %s7
  %s10 = scalar_select 0, %s9, %s7
  // Predicated region
  $region2: #{hyp_loss.1} parent=0 // pred_check
    _
  $region3: #{hyp_loss.1} parent=0 // pred_check_branch
    %12 = sbr.rel (0) target = $region5
  $region4: #{hyp_loss.1} parent=0 // pred_region
    _
  $region5: #{hyp_loss.1} parent=0 // pred_fallthru
    _
  // Predicated region
  $region6: #{hyp_loss.1} parent=0 // pred_check
    _
  $region7: #{hyp_loss.1} parent=0 // pred_check_branch
    %14 = sbr.rel (0) target = $region9
  $region8: #{hyp_loss.1} parent=0 // pred_region
    _
  $region9: #{hyp_loss.1} parent=0 // pred_fallthru
    _
  // Predicated region
  $region10: #{hyp_loss.1} parent=0 // pred_check
    _
  $region11: #{hyp_loss.1} parent=0 // pred_check_branch
    %16 = sbr.rel (0) target = $region13
  $region12: #{hyp_loss.1} parent=0 // pred_region
    _
  $region13: #{hyp_loss.1} parent=0 // pred_fallthru
    _
  // Predicated region
  $region14: #{hyp_loss.1} parent=0 // pred_check
    _
  $region15: #{hyp_loss.1} parent=0 // pred_check_branch
    %18 = sbr.rel (0) target = $region17
  $region16: #{hyp_loss.1} parent=0 // pred_region
    _
  $region17: #{hyp_loss.1} parent=0 // pred_fallthru
    _
  // Predicated region
  $region18: #{hyp_loss.1} parent=0 // pred_check
    _
  $region19: #{hyp_loss.1} parent=0 // pred_check_branch
    %20 = sbr.rel (0) target = $region21
  $region20: #{hyp_loss.1} parent=0 // pred_region
    _
  $region21: #{hyp_loss.1} parent=0 // pred_fallthru
    _
  // Predicated region
  $region22: #{hyp_loss.1} parent=0 // pred_check
    _
  $region23: #{hyp_loss.1} parent=0 // pred_check_branch
    %22 = sbr.rel (0) target = $region25
  $region24: #{hyp_loss.1} parent=0 // pred_region
    _
  $region25: #{hyp_loss.1} parent=0 // pred_fallthru
    _
  %v23 = vlaneseq
  %v24 = vand.u32 %v23, 127
  %v25 = vlaneseq
  %v26 = vshrl.u32 %v25, 7
  %vm27 = vcmp.eq.s32.totalorder %v26, 0
  %v28 = vld [vmem:[%s0] sm:$0xff]
  %v29 = vld [vmem:[%s0 + $0x8] sm:$0xff]
  %v30 = vld [vmem:[%s1] sm:$0xff]
  %v31 = vld [vmem:[%s1 + $0x8] sm:$0xff]
  %v32 = vld [vmem:[%s2] sm:$0xff]
  %v33 = vld [vmem:[%s2 + $0x8] sm:$0xff]
  %v34 = vld [vmem:[%s4] sm:$0xff]
  %v35 = vld [vmem:[%s4 + $0x8] sm:$0xff]
  %36 = vmatpush.xpose.msra.mxu0 0.0
  %37 = vmatpush.xpose.msra.mxu0 0.0
  %38 = vmatpush.xpose.msra.mxu0 0.0
  %39 = vmatpush.xpose.msra.mxu0 0.0
  %40 = vmatpush.xpose.msra.mxu0 0.0
  %41 = vmatpush.xpose.msra.mxu0 0.0
  %42 = vmatpush.xpose.msra.mxu0 0.0
  %43 = vmatpush.xpose.msra.mxu0 0.0
  %44 = vmatpush.xpose.msra.mxu0 0.0
  %45 = vmatpush.xpose.msra.mxu0 0.0
  %46 = vmatpush.xpose.msra.mxu0 0.0
  %47 = vmatpush.xpose.msra.mxu0 0.0
  %48 = vmatpush.xpose.msra.mxu0 0.0
  %49 = vmatpush.xpose.msra.mxu0 0.0
  %50 = vmatpush.xpose.msra.mxu0 %v35
  %51 = vmatpush.xpose.msra.mxu0 %v34
  %52 = vmatmul.f32.gmra.mxu0 %v30
  %v53 = vpop.f32.mrf.mxu0
  %v54 = vadd.f32 0.0, %v53
  %55 = vmatmul.f32.gmra.mxu0 %v31
  %v56 = vpop.f32.mrf.mxu0
  %v57 = vadd.f32 0.0, %v56
  %58 = vdwg.mxu0
  %v59 = vld [vmem:[%s3] sm:$0xff]
  %v60 = vld [vmem:[%s3 + $0x8] sm:$0xff]
  %61 = vmatpush.xpose.msra.mxu0 0.0
  %62 = vmatpush.xpose.msra.mxu0 0.0
  %63 = vmatpush.xpose.msra.mxu0 0.0
  %64 = vmatpush.xpose.msra.mxu0 0.0
  %65 = vmatpush.xpose.msra.mxu0 0.0
  %66 = vmatpush.xpose.msra.mxu0 0.0
  %67 = vmatpush.xpose.msra.mxu0 0.0
  %68 = vmatpush.xpose.msra.mxu0 0.0
  %69 = vmatpush.xpose.msra.mxu0 0.0
  %70 = vmatpush.xpose.msra.mxu0 0.0
  %71 = vmatpush.xpose.msra.mxu0 0.0
  %72 = vmatpush.xpose.msra.mxu0 0.0
  %73 = vmatpush.xpose.msra.mxu0 0.0
  %74 = vmatpush.xpose.msra.mxu0 0.0
  %75 = vmatpush.xpose.msra.mxu0 %v60
  %76 = vmatpush.xpose.msra.mxu0 %v59
  %77 = vmatmul.f32.gmra.mxu0 %v28
  %v78 = vpop.f32.mrf.mxu0
  %v79 = vadd.f32 0.0, %v78
  %80 = vmatmul.f32.gmra.mxu0 %v29
  %v81 = vpop.f32.mrf.mxu0
  %v82 = vadd.f32 0.0, %v81
  %83 = vdwg.mxu0
  %vm84 = vcmp.eq.f32.partialorder %v54, 0.0
  %vm85 = vcmp.eq.f32.partialorder %v57, 0.0
  %87 = vset.pattern.permute.xlu0 0
  %88 = vperm.xlu0 %87, %v32
  %v89 = vpop.permute.xlu0 %88
  %92 = vset.pattern.permute.xlu0 0
  %93 = vperm.xlu0 %92, %v33
  %v94 = vpop.permute.xlu0 %93
  %v96 = vsel %vm84, %v89, 0.0
  %v97 = vsel %vm85, %v94, 0.0
  %v98 = vsub.f32 %v79, 0.5
  %v99 = vsub.f32 %v82, 0.5
  %v100 = vmax.f32 %v98, 0.0
  %v101 = vmax.f32 %v99, 0.0
  %v102 = vmul.f32 %v96, %v100
  %v103 = vmul.f32 %v97, %v101
  %vm104 = vcmask 130048
  %v105 = vsel %vm104, %v102, 0.0
  %v106 = vsel %vm104, %v103, 0.0
  %v107 = vadd.f32 %v105, %v106
  %108 = vadd.xlane.f32.xlu0 %v107
  %v109 = vpop.xlane.xlu0 %108
  %v110 = vrot.slane %v109, 4
  %v111 = vadd.f32 %v109, %v110
  %v112 = vrot.slane %v111, 2
  %v113 = vadd.f32 %v111, %v112
  %v114 = vrot.slane %v113, 1
  %v115 = vadd.f32 %v113, %v114
  %s116 = vtos %v115
  %v117 = vsel %vm104, %v96, 0.0
  %v118 = vsel %vm104, %v97, 0.0
  %v119 = vadd.f32 %v117, %v118
  %120 = vadd.xlane.f32.xlu0 %v119
  %v121 = vpop.xlane.xlu0 %120
  %v122 = vrot.slane %v121, 4
  %v123 = vadd.f32 %v121, %v122
  %v124 = vrot.slane %v123, 2
  %v125 = vadd.f32 %v123, %v124
  %v126 = vrot.slane %v125, 1
  %v127 = vadd.f32 %v125, %v126
  %s128 = vtos %v127
  %p129 = scmp.eq.s32.totalorder 0, 0
  %s130 = scalar_select %p129, 1.0, 2.0
  %s131 = smul.f32 %s130, %s116
  %vm132 = vcmp.eq.s32.totalorder %v24, 2
  %vm133 = vmand %vm27, %vm132
  %v134 = vstv %s131
  %v135 = vsel %vm133, %v134, 0.0
  %s136 = smul.f32 %s130, %s128
  %vm137 = vcmp.eq.s32.totalorder %v24, 3
  %vm138 = vmand %vm27, %vm137
  %v139 = vstv %s136
  %v140 = vsel %vm138, %v139, 0.0
  %v141 = vadd.f32 %v135, %v140
  // Predicated region
  $region26: #{hyp_loss.1} parent=0 // pred_check
    %p142 = pneg %p129
  $region27: #{hyp_loss.1} parent=0 // pred_check_branch
    %144 = sbr.rel (%p142) target = $region29
  $region28: #{hyp_loss.1} parent=0 // pred_region
    %v145 = vld [vmem:[%s5] sm:$0xff]
    %v146 = vld [vmem:[%s5 + $0x8] sm:$0xff]
    %v147 = vld [vmem:[%s5 + $0x10] sm:$0xff]
    %v148 = vld [vmem:[%s5 + $0x18] sm:$0xff]
    %v149 = vld [vmem:[%s5 + $0x20] sm:$0xff]
    %v150 = vld [vmem:[%s5 + $0x28] sm:$0xff]
    %v151 = vld [vmem:[%s5 + $0x30] sm:$0xff]
    %v152 = vld [vmem:[%s5 + $0x38] sm:$0xff]
    %v153 = vld [vmem:[%s5 + $0x40] sm:$0xff]
    %v154 = vld [vmem:[%s5 + $0x48] sm:$0xff]
    %v155 = vld [vmem:[%s5 + $0x50] sm:$0xff]
    %v156 = vld [vmem:[%s5 + $0x58] sm:$0xff]
    %v157 = vld [vmem:[%s5 + $0x60] sm:$0xff]
    %v158 = vld [vmem:[%s5 + $0x68] sm:$0xff]
    %v159 = vld [vmem:[%s5 + $0x70] sm:$0xff]
    %v160 = vld [vmem:[%s5 + $0x78] sm:$0xff]
    %161 = vmatpush.xpose.msra.mxu0 %v160
    %162 = vmatpush.xpose.msra.mxu0 %v159
    %163 = vmatpush.xpose.msra.mxu0 %v158
    %164 = vmatpush.xpose.msra.mxu0 %v157
    %165 = vmatpush.xpose.msra.mxu0 %v156
    %166 = vmatpush.xpose.msra.mxu0 %v155
    %167 = vmatpush.xpose.msra.mxu0 %v154
    %168 = vmatpush.xpose.msra.mxu0 %v153
    %169 = vmatpush.xpose.msra.mxu0 %v152
    %170 = vmatpush.xpose.msra.mxu0 %v151
    %171 = vmatpush.xpose.msra.mxu0 %v150
    %172 = vmatpush.xpose.msra.mxu0 %v149
    %173 = vmatpush.xpose.msra.mxu0 %v148
    %174 = vmatpush.xpose.msra.mxu0 %v147
    %175 = vmatpush.xpose.msra.mxu0 %v146
    %176 = vmatpush.xpose.msra.mxu0 %v145
    %177 = vmatmul.f32.gmra.mxu0 %v28
    %v178 = vpop.f32.mrf.mxu0
    %v179 = vadd.f32 0.0, %v178
    %180 = vmatmul.f32.gmra.mxu0 %v29
    %v181 = vpop.f32.mrf.mxu0
    %v182 = vadd.f32 0.0, %v181
    %183 = vdwg.mxu0
    %v184 = vmul.f32 %v30, %v179
    %v185 = vmul.f32 %v31, %v182
    %v186 = vadd.f32 %v184, %v185
    %187 = vadd.xlane.f32.xlu0 %v186
    %v188 = vpop.xlane.xlu0 %187
    %v189 = vrot.slane %v188, 4
    %v190 = vadd.f32 %v188, %v189
    %v191 = vrot.slane %v190, 2
    %v192 = vadd.f32 %v190, %v191
    %v193 = vrot.slane %v192, 1
    %v194 = vadd.f32 %v192, %v193
    %s195 = vtos %v194
    %v196 = vsub.f32 1.0, %v30
    %v197 = vsub.f32 1.0, %v31
    %v198 = vsub.f32 %v179, 0.5
    %v199 = vsub.f32 %v182, 0.5
    %v200 = vmax.f32 %v198, 0.0
    %v201 = vmax.f32 %v199, 0.0
    %v202 = vmul.f32 %v196, %v200
    %v203 = vmul.f32 %v197, %v201
    %v204 = vadd.f32 %v202, %v203
    %205 = vadd.xlane.f32.xlu0 %v204
    %v206 = vpop.xlane.xlu0 %205
    %v207 = vrot.slane %v206, 4
    %v208 = vadd.f32 %v206, %v207
    %v209 = vrot.slane %v208, 2
    %v210 = vadd.f32 %v208, %v209
    %v211 = vrot.slane %v210, 1
    %v212 = vadd.f32 %v210, %v211
    %s213 = vtos %v212
    %vm214 = vcmp.eq.s32.totalorder %v24, 0
    %vm215 = vmand %vm27, %vm214
    %v216 = vstv %s195
    %v217 = vsel %vm215, %v216, 0.0
    %vm218 = vcmp.eq.s32.totalorder %v24, 1
    %vm219 = vmand %vm27, %vm218
    %v220 = vstv %s213
    %v221 = vsel %vm219, %v220, 0.0
    %v222 = vadd.f32 %v217, %v221
    %v223 = vadd.f32 %v222, %v141
    %224 = vst [vmem:[%s6] sm:$0xff] %v223
  $region29: #{hyp_loss.1} parent=0 // pred_fallthru
    _
  %p225 = scmp.gt.s32.totalorder 0, 0
  // Predicated region
  $region30: #{hyp_loss.1} parent=0 // pred_check
    %p226 = pneg %p225
  $region31: #{hyp_loss.1} parent=0 // pred_check_branch
    %228 = sbr.rel (%p226) target = $region33
  $region32: #{hyp_loss.1} parent=0 // pred_region
    %v229 = vld [vmem:[%s6] sm:$0xff]
    %v230 = vadd.f32 %v229, %v141
    %231 = vst [vmem:[%s6] sm:$0xff] %v230
  $region33: #{hyp_loss.1} parent=0 // pred_fallthru
    _
  // Predicated region
  $region34: #{hyp_loss.1} parent=0 // pred_check
    _
  $region35: #{hyp_loss.1} parent=0 // pred_check_branch
    %233 = sbr.rel (0) target = $region37
  $region36: #{hyp_loss.1} parent=0 // pred_region
    _
  $region37: #{hyp_loss.1} parent=0 // pred_fallthru
    _
  // Predicated region
  $region38: #{hyp_loss.1} parent=0 // pred_check
    _
  $region39: #{hyp_loss.1} parent=0 // pred_check_branch
    %235 = sbr.rel (0) target = $region41
  $region40: #{hyp_loss.1} parent=0 // pred_region
    _
  $region41: #{hyp_loss.1} parent=0 // pred_fallthru
    _

</llo_original>
